<compile_context>
chip_gen: v7x
topology: tpu7x:2x2x1
jax: 0.10.0
libtpu: 0.0.40
codegen_flags: <defaults>
</compile_context>

<pallas_src>
import jax
import jax.numpy as jnp
from jax.experimental import pallas as pl
from jax.experimental.pallas import tpu as pltpu

EPS = 1e-5
_MAX_NB = 8  # cap on samples per grid step (keeps the static unroll small)


# --------------------------------------------------------------------------- #
# Per-generation sizing
# --------------------------------------------------------------------------- #
def _vmem_limit_bytes():
    """Scoped-VMEM budget: ~75% of physical, capped (v5e/v6e: 128 MiB -> 96 MiB,
    v7x: 64 MiB/TC -> 48 MiB)."""
    cap = 64 * 1024 * 1024
    try:
        cap = int(getattr(pltpu.get_tpu_info(), "vmem_capacity_bytes", cap))
    except Exception:
        pass
    return max(32 * 1024 * 1024, min((cap * 3) // 4, 96 * 1024 * 1024))


def _pick_batch_block(n, cin, cout, l, vmem_limit):
    """Samples per grid step: biggest block fitting the VMEM budget, keeping
    >= 2 grid steps (dual-TC chips) and an even divisor of N."""
    cmax = max(cin, cout)
    # Heaviest pass, per sample: double-buffered bf16 in/out activation tiles,
    # transient (3C, L) bf16 taps, and f32 matmul/BN temporaries.
    per_sample = (2 * 2 * (cout * l * 2)
                  + 3 * cmax * l * 2
                  + 2 * cmax * l * 4)
    budget = max(vmem_limit // 2, 1)
    target = max(1, budget // max(per_sample, 1))
    target = min(target, _MAX_NB)
    if n >= 2:
        target = min(target, max(1, n // 2))  # keep the grid >= 2 steps
    target = max(1, min(target, n))
    for nb in range(target, 0, -1):
        if n % nb == 0:
            return nb
    return 1


# --------------------------------------------------------------------------- #
# Kernels
# --------------------------------------------------------------------------- #
def _shifted_taps(x):
    """Stack [x[:, l-1]; x[:, l]; x[:, l+1]] (zero padded) on the channel axis.

    Input is already bf16, so the (3C, L) buffer and its lane shifts are built
    at half width.
    """
    c, l = x.shape
    z = jnp.zeros((c, 1), x.dtype)
    x_lo = jnp.concatenate([z, x[:, : l - 1]], axis=1)   # value at l-1
    x_hi = jnp.concatenate([x[:, 1:], z], axis=1)        # value at l+1
    return jnp.concatenate([x_lo, x, x_hi], axis=0)      # (3*C, L)


def _partial_stats(y):
    """Per-channel [sum, sum-of-squares] over L from the f32 accumulator -> (C, 2)."""
    return jnp.concatenate(
        [jnp.sum(y, axis=-1, keepdims=True),
         jnp.sum(y * y, axis=-1, keepdims=True)], axis=1)


def _conv1_stats_kernel(x_ref, w_ref, y_ref, st_ref):
    # x_ref: (NB, Cin, L) f32 | w_ref: (Cout, 3*Cin) bf16
    # y_ref: (NB, Cout, L) bf16 | st_ref: (1, Cout, 2) f32
    nb = x_ref.shape[0]
    stat = jnp.zeros(st_ref.shape[1:], jnp.float32)
    for i in range(nb):  # static, small unroll (one grid step)
        taps = _shifted_taps(x_ref[i].astype(jnp.bfloat16))        # (3*Cin, L) bf16
        y = jnp.dot(w_ref[...], taps, preferred_element_type=jnp.float32)
        stat = stat + _partial_stats(y)                            # stats from f32
        y_ref[i] = y.astype(y_ref.dtype)                           # store bf16
    st_ref[0] = stat


def _bn_relu_conv2_stats_kernel(y1_ref, sc_ref, sh_ref, w_ref, y_ref, st_ref):
    # Folded BN1 (one FMA/elt) + ReLU, then conv2 as a single stacked-tap matmul.
    nb = y1_ref.shape[0]
    stat = jnp.zeros(st_ref.shape[1:], jnp.float32)
    for i in range(nb):
        h = jnp.maximum(
            y1_ref[i].astype(jnp.float32) * sc_ref[...] + sh_ref[...], 0.0)
        taps = _shifted_taps(h.astype(jnp.bfloat16))               # (3*Cout, L) bf16
        y = jnp.dot(w_ref[...], taps, preferred_element_type=jnp.float32)
        stat = stat + _partial_stats(y)
        y_ref[i] = y.astype(y_ref.dtype)
    st_ref[0] = stat


def _bn_shortcut_relu_kernel(y2_ref, x_ref, sc_ref, sh_ref, ws_ref, bs_ref, o_ref):
    # 1x1-conv shortcut computed right before the residual add (short live range).
    nb = y2_ref.shape[0]
    for i in range(nb):
        ident = jnp.dot(ws_ref[...], x_ref[i].astype(jnp.bfloat16),
                        preferred_element_type=jnp.float32) + bs_ref[...]
        o_ref[i] = jnp.maximum(
            y2_ref[i].astype(jnp.float32) * sc_ref[...] + sh_ref[...] + ident, 0.0)


def _bn_identity_relu_kernel(y2_ref, x_ref, sc_ref, sh_ref, o_ref):
    # Identity shortcut (in_channels == out_channels).
    nb = y2_ref.shape[0]
    for i in range(nb):
        o_ref[i] = jnp.maximum(
            y2_ref[i].astype(jnp.float32) * sc_ref[...] + sh_ref[...] + x_ref[i], 0.0)


# --------------------------------------------------------------------------- #
# Wrapper
# --------------------------------------------------------------------------- #
def _act_spec(nb, c, l):
    return pl.BlockSpec((nb, c, l), lambda n: (n, 0, 0))


def _full_spec(shape):
    zeros = (0,) * len(shape)
    return pl.BlockSpec(shape, lambda n: zeros)


def _bn_fold(partial_stats, gamma, beta, count):
    """Reduce per-block [sum, sumsq] partials and fold BN into per-channel FMA."""
    tot = jnp.sum(partial_stats, axis=0)                      # (C, 2)
    mean = tot[:, 0] / count
    var = jnp.maximum(tot[:, 1] / count - mean * mean, 0.0)   # biased variance
    scale = gamma / jnp.sqrt(var + EPS)
    shift = beta - mean * scale
    return scale[:, None], shift[:, None]                     # (C, 1) each


def residual_block(x, p):
    """x: (N, Cin, L) f32.  p: params in PyTorch layout (see make_params)."""
    n, cin, l = x.shape
    cout = p['w1'].shape[0]

    vmem_limit = _vmem_limit_bytes()
    nb = _pick_batch_block(n, cin, cout, l, vmem_limit)
    grid = (n // nb,)
    compiler_params = pltpu.CompilerParams(
        dimension_semantics=("parallel",),
        vmem_limit_bytes=vmem_limit,
    )

    # Kernel-ready params: tap-stacked bf16 conv weights.  Conv biases b1/b2 are
    # intentionally NOT used in passes 1/2 (BN cancels them exactly; forward
    # output is unchanged).
    w1s = jnp.concatenate([p['w1'][:, :, k] for k in range(3)],
                          axis=1).astype(jnp.bfloat16)
    w2s = jnp.concatenate([p['w2'][:, :, k] for k in range(3)],
                          axis=1).astype(jnp.bfloat16)

    act_bf16 = jax.ShapeDtypeStruct((n, cout, l), jnp.bfloat16)
    stats = jax.ShapeDtypeStruct((grid[0], cout, 2), jnp.float32)
    st_spec = pl.BlockSpec((1, cout, 2), lambda i: (i, 0, 0))

    # ---- pass 1: conv1 (stacked-tap bf16 matmul) + BN1 partial stats ----------
    y1, st1 = pl.pallas_call(
        _conv1_stats_kernel,
        grid=grid,
        in_specs=[_act_spec(nb, cin, l), _full_spec((cout, 3 * cin))],
        out_specs=[_act_spec(nb, cout, l), st_spec],
        out_shape=[act_bf16, stats],
        compiler_params=compiler_params,
    )(x, w1s)
    sc1, sh1 = _bn_fold(st1, p['g1'], p['be1'], n * l)

    # ---- pass 2: BN1(folded)+ReLU -> conv2 + BN2 partial stats ----------------
    y2, st2 = pl.pallas_call(
        _bn_relu_conv2_stats_kernel,
        grid=grid,
        in_specs=[_act_spec(nb, cout, l), _full_spec((cout, 1)), _full_spec((cout, 1)),
                  _full_spec((cout, 3 * cout))],
        out_specs=[_act_spec(nb, cout, l), st_spec],
        out_shape=[act_bf16, stats],
        compiler_params=compiler_params,
    )(y1, sc1, sh1, w2s)
    sc2, sh2 = _bn_fold(st2, p['g2'], p['be2'], n * l)

    # ---- pass 3: BN2(folded) + shortcut + residual add + ReLU -----------------
    out_shape = jax.ShapeDtypeStruct((n, cout, l), jnp.float32)
    if 'ws' in p:  # 1x1-conv shortcut (in_channels != out_channels)
        ws = p['ws'].astype(jnp.bfloat16)
        bs = p['bs'][:, None].astype(jnp.float32)
        out = pl.pallas_call(
            _bn_shortcut_relu_kernel,
            grid=grid,
            in_specs=[_act_spec(nb, cout, l), _act_spec(nb, cin, l),
                      _full_spec((cout, 1)), _full_spec((cout, 1)),
                      _full_spec((cout, cin)), _full_spec((cout, 1))],
            out_specs=_act_spec(nb, cout, l),
            out_shape=out_shape,
            compiler_params=compiler_params,
        )(y2, x, sc2, sh2, ws, bs)
    else:          # identity shortcut
        out = pl.pallas_call(
            _bn_identity_relu_kernel,
            grid=grid,
            in_specs=[_act_spec(nb, cout, l), _act_spec(nb, cout, l),
                      _full_spec((cout, 1)), _full_spec((cout, 1))],
            out_specs=_act_spec(nb, cout, l),
            out_shape=out_shape,
            compiler_params=compiler_params,
        )(y2, x, sc2, sh2)
    return out


# --------------------------------------------------------------------------- #
# Synthetic parameters (PyTorch-like uniform fan-in init, PyTorch layouts)
# --------------------------------------------------------------------------- #
def make_params(key, in_channels, out_channels):
    ks = jax.random.split(key, 6)

    def u(k, shape, fan_in):
        bound = 1.0 / jnp.sqrt(jnp.float32(fan_in))
        return jax.random.uniform(k, shape, jnp.float32, -bound, bound)

    p = dict(
        w1=u(ks[0], (out_channels, in_channels, 3), in_channels * 3),
        b1=u(ks[1], (out_channels,), in_channels * 3),   # cancelled by BN1 (fwd)
        w2=u(ks[2], (out_channels, out_channels, 3), out_channels * 3),
        b2=u(ks[3], (out_channels,), out_channels * 3),  # cancelled by BN2 (fwd)
        g1=jnp.ones((out_channels,), jnp.float32),
        be1=jnp.zeros((out_channels,), jnp.float32),
        g2=jnp.ones((out_channels,), jnp.float32),
        be2=jnp.zeros((out_channels,), jnp.float32),
    )
    if in_channels != out_channels:
        p['ws'] = u(ks[4], (out_channels, in_channels), in_channels)  # 1x1 conv
        p['bs'] = u(ks[5], (out_channels,), in_channels)
    return p


if __name__ == "__main__":
    key = jax.random.PRNGKey(0)
    kx, kp = jax.random.split(key)

    N, C_IN, C_OUT, L = 2, 4, 8, 16
    x = jax.random.normal(kx, (N, C_IN, L), dtype=jnp.float32)
    params = make_params(kp, C_IN, C_OUT)

    out = jax.jit(residual_block)(x, params)
    jax.block_until_ready(out)
    assert out.shape == (N, C_OUT, L)
    print("KERNEL_OK")
</pallas_src>

<mosaic_0001>
module attributes {stable_mosaic.version = 11 : i64} {
  func.func @_conv1_stats_kernel(%arg0: i32, %arg1: memref<1x4x16xf32, #tpu.memory_space<vmem>>, %arg2: memref<8x12xbf16, #tpu.memory_space<vmem>>, %arg3: memref<1x8x16xbf16, #tpu.memory_space<vmem>>, %arg4: memref<1x8x2xf32, #tpu.memory_space<vmem>>) attributes {dimension_semantics = [#tpu.dimension_semantics<parallel>], iteration_bounds = array<i64: 2>, scalar_prefetch = 0 : i64, scratch_operands = 0 : i64, tpu.core_type = #tpu.core_type<tc>, window_params = [{transform_indices = @transform_0, window_bounds = array<i64: 1, 4, 16>}, {pipeline_mode = #tpu.pipeline_mode<synchronous>, transform_indices = @transform_1, window_bounds = array<i64: 8, 12>}, {transform_indices = @transform_2, window_bounds = array<i64: 1, 8, 16>}, {transform_indices = @transform_3, window_bounds = array<i64: 1, 8, 2>}]} {
    %cst = arith.constant 0.000000e+00 : f32
    %0 = vector.broadcast %cst : f32 to vector<8x2xf32>
    %c0 = arith.constant 0 : index
    %c0_0 = arith.constant 0 : index
    %c0_1 = arith.constant 0 : index
    %1 = vector.load %arg1[%c0, %c0_0, %c0_1] : memref<1x4x16xf32, #tpu.memory_space<vmem>>, vector<1x4x16xf32>
    %2 = vector.shape_cast %1 : vector<1x4x16xf32> to vector<4x16xf32>
    %3 = arith.truncf %2 : vector<4x16xf32> to vector<4x16xbf16>
    %cst_2 = arith.constant 0.000000e+00 : bf16
    %4 = vector.broadcast %cst_2 : bf16 to vector<4x1xbf16>
    %5 = vector.extract_strided_slice %3 {offsets = [0, 0], sizes = [4, 15], strides = [1, 1]} : vector<4x16xbf16> to vector<4x15xbf16>
    %6 = tpu.concatenate %4, %5 in 1 : vector<4x1xbf16>, vector<4x15xbf16> -> vector<4x16xbf16>
    %7 = vector.extract_strided_slice %3 {offsets = [0, 1], sizes = [4, 15], strides = [1, 1]} : vector<4x16xbf16> to vector<4x15xbf16>
    %8 = tpu.concatenate %7, %4 in 1 : vector<4x15xbf16>, vector<4x1xbf16> -> vector<4x16xbf16>
    %9 = tpu.concatenate %6, %3, %8 in 0 : vector<4x16xbf16>, vector<4x16xbf16>, vector<4x16xbf16> -> vector<12x16xbf16>
    %c0_3 = arith.constant 0 : index
    %c0_4 = arith.constant 0 : index
    %10 = vector.load %arg2[%c0_3, %c0_4] : memref<8x12xbf16, #tpu.memory_space<vmem>>, vector<8x12xbf16>
    %cst_5 = arith.constant dense<0.000000e+00> : vector<8x16xf32>
    %11 = tpu.matmul %10, %9, %cst_5 {dimension_numbers = #tpu.dot_dimension_numbers<[1], [0], [0], [1], [0, 0, 1, 1], [], []>} : vector<8x12xbf16>, vector<12x16xbf16>, vector<8x16xf32> -> vector<8x16xf32>
    %cst_6 = arith.constant dense<0.000000e+00> : vector<8xf32>
    %12 = vector.multi_reduction <add>, %11, %cst_6 [1] : vector<8x16xf32> to vector<8xf32>
    %13 = vector.shape_cast %12 : vector<8xf32> to vector<8x1xf32>
    %14 = arith.mulf %11, %11 : vector<8x16xf32>
    %cst_7 = arith.constant dense<0.000000e+00> : vector<8xf32>
    %15 = vector.multi_reduction <add>, %14, %cst_7 [1] : vector<8x16xf32> to vector<8xf32>
    %16 = vector.shape_cast %15 : vector<8xf32> to vector<8x1xf32>
    %17 = tpu.concatenate %13, %16 in 1 : vector<8x1xf32>, vector<8x1xf32> -> vector<8x2xf32>
    %18 = arith.addf %0, %17 : vector<8x2xf32>
    %19 = arith.truncf %11 : vector<8x16xf32> to vector<8x16xbf16>
    %c0_8 = arith.constant 0 : index
    %c0_9 = arith.constant 0 : index
    %c0_10 = arith.constant 0 : index
    %20 = vector.load %arg3[%c0_8, %c0_9, %c0_10] : memref<1x8x16xbf16, #tpu.memory_space<vmem>>, vector<1x8x16xbf16>
    %21 = vector.shape_cast %20 : vector<1x8x16xbf16> to vector<8x16xbf16>
    %22 = vector.shape_cast %19 : vector<8x16xbf16> to vector<1x8x16xbf16>
    tpu.vector_store %arg3[%c0_8, %c0_9, %c0_10], %22 {strides = array<i32>} : memref<1x8x16xbf16, #tpu.memory_space<vmem>>, vector<1x8x16xbf16>,
    %c0_11 = arith.constant 0 : index
    %c0_12 = arith.constant 0 : index
    %c0_13 = arith.constant 0 : index
    %23 = vector.load %arg4[%c0_11, %c0_12, %c0_13] : memref<1x8x2xf32, #tpu.memory_space<vmem>>, vector<1x8x2xf32>
    %24 = vector.shape_cast %23 : vector<1x8x2xf32> to vector<8x2xf32>
    %25 = vector.shape_cast %18 : vector<8x2xf32> to vector<1x8x2xf32>
    tpu.vector_store %arg4[%c0_11, %c0_12, %c0_13], %25 {strides = array<i32>} : memref<1x8x2xf32, #tpu.memory_space<vmem>>, vector<1x8x2xf32>,
    return
  }
  func.func @transform_0(%arg0: i32) -> (i32, i32, i32) {
    %c0_i32 = arith.constant 0 : i32
    %c0_i32_0 = arith.constant 0 : i32
    %c0_i32_1 = arith.constant 0 : i32
    return %arg0, %c0_i32, %c0_i32_0 : i32, i32, i32
  }
  func.func @transform_1(%arg0: i32) -> (i32, i32) {
    %c0_i32 = arith.constant 0 : i32
    %c0_i32_0 = arith.constant 0 : i32
    %c0_i32_1 = arith.constant 0 : i32
    return %c0_i32, %c0_i32_0 : i32, i32
  }
  func.func @transform_2(%arg0: i32) -> (i32, i32, i32) {
    %c0_i32 = arith.constant 0 : i32
    %c0_i32_0 = arith.constant 0 : i32
    %c0_i32_1 = arith.constant 0 : i32
    return %arg0, %c0_i32, %c0_i32_0 : i32, i32, i32
  }
  func.func @transform_3(%arg0: i32) -> (i32, i32, i32) {
    %c0_i32 = arith.constant 0 : i32
    %c0_i32_0 = arith.constant 0 : i32
    %c0_i32_1 = arith.constant 0 : i32
    return %arg0, %c0_i32, %c0_i32_0 : i32, i32, i32
  }
}

module attributes {stable_mosaic.version = 11 : i64} {
  func.func @_bn_relu_conv2_stats_kernel(%arg0: i32, %arg1: memref<1x8x16xbf16, #tpu.memory_space<vmem>>, %arg2: memref<8x1xf32, #tpu.memory_space<vmem>>, %arg3: memref<8x1xf32, #tpu.memory_space<vmem>>, %arg4: memref<8x24xbf16, #tpu.memory_space<vmem>>, %arg5: memref<1x8x16xbf16, #tpu.memory_space<vmem>>, %arg6: memref<1x8x2xf32, #tpu.memory_space<vmem>>) attributes {dimension_semantics = [#tpu.dimension_semantics<parallel>], iteration_bounds = array<i64: 2>, scalar_prefetch = 0 : i64, scratch_operands = 0 : i64, tpu.core_type = #tpu.core_type<tc>, window_params = [{transform_indices = @transform_0, window_bounds = array<i64: 1, 8, 16>}, {pipeline_mode = #tpu.pipeline_mode<synchronous>, transform_indices = @transform_1, window_bounds = array<i64: 8, 1>}, {pipeline_mode = #tpu.pipeline_mode<synchronous>, transform_indices = @transform_2, window_bounds = array<i64: 8, 1>}, {pipeline_mode = #tpu.pipeline_mode<synchronous>, transform_indices = @transform_3, window_bounds = array<i64: 8, 24>}, {transform_indices = @transform_4, window_bounds = array<i64: 1, 8, 16>}, {transform_indices = @transform_5, window_bounds = array<i64: 1, 8, 2>}]} {
    %cst = arith.constant 0.000000e+00 : f32
    %0 = vector.broadcast %cst : f32 to vector<8x2xf32>
    %c0 = arith.constant 0 : index
    %c0_0 = arith.constant 0 : index
    %c0_1 = arith.constant 0 : index
    %1 = vector.load %arg1[%c0, %c0_0, %c0_1] : memref<1x8x16xbf16, #tpu.memory_space<vmem>>, vector<1x8x16xbf16>
    %2 = vector.shape_cast %1 : vector<1x8x16xbf16> to vector<8x16xbf16>
    %3 = arith.extf %2 : vector<8x16xbf16> to vector<8x16xf32>
    %c0_2 = arith.constant 0 : index
    %c0_3 = arith.constant 0 : index
    %4 = vector.load %arg2[%c0_2, %c0_3] : memref<8x1xf32, #tpu.memory_space<vmem>>, vector<8x1xf32>
    %5 = vector.broadcast %4 : vector<8x1xf32> to vector<8x16xf32>
    %6 = arith.mulf %3, %5 : vector<8x16xf32>
    %c0_4 = arith.constant 0 : index
    %c0_5 = arith.constant 0 : index
    %7 = vector.load %arg3[%c0_4, %c0_5] : memref<8x1xf32, #tpu.memory_space<vmem>>, vector<8x1xf32>
    %8 = vector.broadcast %7 : vector<8x1xf32> to vector<8x16xf32>
    %9 = arith.addf %6, %8 : vector<8x16xf32>
    %cst_6 = arith.constant 0.000000e+00 : f32
    %10 = vector.broadcast %cst_6 : f32 to vector<8x16xf32>
    %11 = arith.maximumf %9, %10 : vector<8x16xf32>
    %12 = arith.truncf %11 : vector<8x16xf32> to vector<8x16xbf16>
    %cst_7 = arith.constant 0.000000e+00 : bf16
    %13 = vector.broadcast %cst_7 : bf16 to vector<8x1xbf16>
    %14 = vector.extract_strided_slice %12 {offsets = [0, 0], sizes = [8, 15], strides = [1, 1]} : vector<8x16xbf16> to vector<8x15xbf16>
    %15 = tpu.concatenate %13, %14 in 1 : vector<8x1xbf16>, vector<8x15xbf16> -> vector<8x16xbf16>
    %16 = vector.extract_strided_slice %12 {offsets = [0, 1], sizes = [8, 15], strides = [1, 1]} : vector<8x16xbf16> to vector<8x15xbf16>
    %17 = tpu.concatenate %16, %13 in 1 : vector<8x15xbf16>, vector<8x1xbf16> -> vector<8x16xbf16>
    %18 = tpu.concatenate %15, %12, %17 in 0 : vector<8x16xbf16>, vector<8x16xbf16>, vector<8x16xbf16> -> vector<24x16xbf16>
    %c0_8 = arith.constant 0 : index
    %c0_9 = arith.constant 0 : index
    %19 = vector.load %arg4[%c0_8, %c0_9] : memref<8x24xbf16, #tpu.memory_space<vmem>>, vector<8x24xbf16>
    %cst_10 = arith.constant dense<0.000000e+00> : vector<8x16xf32>
    %20 = tpu.matmul %19, %18, %cst_10 {dimension_numbers = #tpu.dot_dimension_numbers<[1], [0], [0], [1], [0, 0, 1, 1], [], []>} : vector<8x24xbf16>, vector<24x16xbf16>, vector<8x16xf32> -> vector<8x16xf32>
    %cst_11 = arith.constant dense<0.000000e+00> : vector<8xf32>
    %21 = vector.multi_reduction <add>, %20, %cst_11 [1] : vector<8x16xf32> to vector<8xf32>
    %22 = vector.shape_cast %21 : vector<8xf32> to vector<8x1xf32>
    %23 = arith.mulf %20, %20 : vector<8x16xf32>
    %cst_12 = arith.constant dense<0.000000e+00> : vector<8xf32>
    %24 = vector.multi_reduction <add>, %23, %cst_12 [1] : vector<8x16xf32> to vector<8xf32>
    %25 = vector.shape_cast %24 : vector<8xf32> to vector<8x1xf32>
    %26 = tpu.concatenate %22, %25 in 1 : vector<8x1xf32>, vector<8x1xf32> -> vector<8x2xf32>
    %27 = arith.addf %0, %26 : vector<8x2xf32>
    %28 = arith.truncf %20 : vector<8x16xf32> to vector<8x16xbf16>
    %c0_13 = arith.constant 0 : index
    %c0_14 = arith.constant 0 : index
    %c0_15 = arith.constant 0 : index
    %29 = vector.load %arg5[%c0_13, %c0_14, %c0_15] : memref<1x8x16xbf16, #tpu.memory_space<vmem>>, vector<1x8x16xbf16>
    %30 = vector.shape_cast %29 : vector<1x8x16xbf16> to vector<8x16xbf16>
    %31 = vector.shape_cast %28 : vector<8x16xbf16> to vector<1x8x16xbf16>
    tpu.vector_store %arg5[%c0_13, %c0_14, %c0_15], %31 {strides = array<i32>} : memref<1x8x16xbf16, #tpu.memory_space<vmem>>, vector<1x8x16xbf16>,
    %c0_16 = arith.constant 0 : index
    %c0_17 = arith.constant 0 : index
    %c0_18 = arith.constant 0 : index
    %32 = vector.load %arg6[%c0_16, %c0_17, %c0_18] : memref<1x8x2xf32, #tpu.memory_space<vmem>>, vector<1x8x2xf32>
    %33 = vector.shape_cast %32 : vector<1x8x2xf32> to vector<8x2xf32>
    %34 = vector.shape_cast %27 : vector<8x2xf32> to vector<1x8x2xf32>
    tpu.vector_store %arg6[%c0_16, %c0_17, %c0_18], %34 {strides = array<i32>} : memref<1x8x2xf32, #tpu.memory_space<vmem>>, vector<1x8x2xf32>,
    return
  }
  func.func @transform_0(%arg0: i32) -> (i32, i32, i32) {
    %c0_i32 = arith.constant 0 : i32
    %c0_i32_0 = arith.constant 0 : i32
    %c0_i32_1 = arith.constant 0 : i32
    return %arg0, %c0_i32, %c0_i32_0 : i32, i32, i32
  }
  func.func @transform_1(%arg0: i32) -> (i32, i32) {
    %c0_i32 = arith.constant 0 : i32
    %c0_i32_0 = arith.constant 0 : i32
    %c0_i32_1 = arith.constant 0 : i32
    return %c0_i32, %c0_i32_0 : i32, i32
  }
  func.func @transform_2(%arg0: i32) -> (i32, i32) {
    %c0_i32 = arith.constant 0 : i32
    %c0_i32_0 = arith.constant 0 : i32
    %c0_i32_1 = arith.constant 0 : i32
    return %c0_i32, %c0_i32_0 : i32, i32
  }
  func.func @transform_3(%arg0: i32) -> (i32, i32) {
    %c0_i32 = arith.constant 0 : i32
    %c0_i32_0 = arith.constant 0 : i32
    %c0_i32_1 = arith.constant 0 : i32
    return %c0_i32, %c0_i32_0 : i32, i32
  }
  func.func @transform_4(%arg0: i32) -> (i32, i32, i32) {
    %c0_i32 = arith.constant 0 : i32
    %c0_i32_0 = arith.constant 0 : i32
    %c0_i32_1 = arith.constant 0 : i32
    return %arg0, %c0_i32, %c0_i32_0 : i32, i32, i32
  }
  func.func @transform_5(%arg0: i32) -> (i32, i32, i32) {
    %c0_i32 = arith.constant 0 : i32
    %c0_i32_0 = arith.constant 0 : i32
    %c0_i32_1 = arith.constant 0 : i32
    return %arg0, %c0_i32, %c0_i32_0 : i32, i32, i32
  }
}

module attributes {stable_mosaic.version = 11 : i64} {
  func.func @_bn_shortcut_relu_kernel(%arg0: i32, %arg1: memref<1x8x16xbf16, #tpu.memory_space<vmem>>, %arg2: memref<1x4x16xf32, #tpu.memory_space<vmem>>, %arg3: memref<8x1xf32, #tpu.memory_space<vmem>>, %arg4: memref<8x1xf32, #tpu.memory_space<vmem>>, %arg5: memref<8x4xbf16, #tpu.memory_space<vmem>>, %arg6: memref<8x1xf32, #tpu.memory_space<vmem>>, %arg7: memref<1x8x16xf32, #tpu.memory_space<vmem>>) attributes {dimension_semantics = [#tpu.dimension_semantics<parallel>], iteration_bounds = array<i64: 2>, scalar_prefetch = 0 : i64, scratch_operands = 0 : i64, tpu.core_type = #tpu.core_type<tc>, window_params = [{transform_indices = @transform_0, window_bounds = array<i64: 1, 8, 16>}, {transform_indices = @transform_1, window_bounds = array<i64: 1, 4, 16>}, {pipeline_mode = #tpu.pipeline_mode<synchronous>, transform_indices = @transform_2, window_bounds = array<i64: 8, 1>}, {pipeline_mode = #tpu.pipeline_mode<synchronous>, transform_indices = @transform_3, window_bounds = array<i64: 8, 1>}, {pipeline_mode = #tpu.pipeline_mode<synchronous>, transform_indices = @transform_4, window_bounds = array<i64: 8, 4>}, {pipeline_mode = #tpu.pipeline_mode<synchronous>, transform_indices = @transform_5, window_bounds = array<i64: 8, 1>}, {transform_indices = @transform_6, window_bounds = array<i64: 1, 8, 16>}]} {
    %c0 = arith.constant 0 : index
    %c0_0 = arith.constant 0 : index
    %0 = vector.load %arg5[%c0, %c0_0] : memref<8x4xbf16, #tpu.memory_space<vmem>>, vector<8x4xbf16>
    %c0_1 = arith.constant 0 : index
    %c0_2 = arith.constant 0 : index
    %c0_3 = arith.constant 0 : index
    %1 = vector.load %arg2[%c0_1, %c0_2, %c0_3] : memref<1x4x16xf32, #tpu.memory_space<vmem>>, vector<1x4x16xf32>
    %2 = vector.shape_cast %1 : vector<1x4x16xf32> to vector<4x16xf32>
    %3 = arith.truncf %2 : vector<4x16xf32> to vector<4x16xbf16>
    %cst = arith.constant dense<0.000000e+00> : vector<8x16xf32>
    %4 = tpu.matmul %0, %3, %cst {dimension_numbers = #tpu.dot_dimension_numbers<[1], [0], [0], [1], [0, 0, 1, 1], [], []>} : vector<8x4xbf16>, vector<4x16xbf16>, vector<8x16xf32> -> vector<8x16xf32>
    %c0_4 = arith.constant 0 : index
    %c0_5 = arith.constant 0 : index
    %5 = vector.load %arg6[%c0_4, %c0_5] : memref<8x1xf32, #tpu.memory_space<vmem>>, vector<8x1xf32>
    %6 = vector.broadcast %5 : vector<8x1xf32> to vector<8x16xf32>
    %7 = arith.addf %4, %6 : vector<8x16xf32>
    %c0_6 = arith.constant 0 : index
    %c0_7 = arith.constant 0 : index
    %c0_8 = arith.constant 0 : index
    %8 = vector.load %arg1[%c0_6, %c0_7, %c0_8] : memref<1x8x16xbf16, #tpu.memory_space<vmem>>, vector<1x8x16xbf16>
    %9 = vector.shape_cast %8 : vector<1x8x16xbf16> to vector<8x16xbf16>
    %10 = arith.extf %9 : vector<8x16xbf16> to vector<8x16xf32>
    %c0_9 = arith.constant 0 : index
    %c0_10 = arith.constant 0 : index
    %11 = vector.load %arg3[%c0_9, %c0_10] : memref<8x1xf32, #tpu.memory_space<vmem>>, vector<8x1xf32>
    %12 = vector.broadcast %11 : vector<8x1xf32> to vector<8x16xf32>
    %13 = arith.mulf %10, %12 : vector<8x16xf32>
    %c0_11 = arith.constant 0 : index
    %c0_12 = arith.constant 0 : index
    %14 = vector.load %arg4[%c0_11, %c0_12] : memref<8x1xf32, #tpu.memory_space<vmem>>, vector<8x1xf32>
    %15 = vector.broadcast %14 : vector<8x1xf32> to vector<8x16xf32>
    %16 = arith.addf %13, %15 : vector<8x16xf32>
    %17 = arith.addf %16, %7 : vector<8x16xf32>
    %cst_13 = arith.constant 0.000000e+00 : f32
    %18 = vector.broadcast %cst_13 : f32 to vector<8x16xf32>
    %19 = arith.maximumf %17, %18 : vector<8x16xf32>
    %c0_14 = arith.constant 0 : index
    %c0_15 = arith.constant 0 : index
    %c0_16 = arith.constant 0 : index
    %20 = vector.load %arg7[%c0_14, %c0_15, %c0_16] : memref<1x8x16xf32, #tpu.memory_space<vmem>>, vector<1x8x16xf32>
    %21 = vector.shape_cast %20 : vector<1x8x16xf32> to vector<8x16xf32>
    %22 = vector.shape_cast %19 : vector<8x16xf32> to vector<1x8x16xf32>
    tpu.vector_store %arg7[%c0_14, %c0_15, %c0_16], %22 {strides = array<i32>} : memref<1x8x16xf32, #tpu.memory_space<vmem>>, vector<1x8x16xf32>,
    return
  }
  func.func @transform_0(%arg0: i32) -> (i32, i32, i32) {
    %c0_i32 = arith.constant 0 : i32
    %c0_i32_0 = arith.constant 0 : i32
    %c0_i32_1 = arith.constant 0 : i32
    return %arg0, %c0_i32, %c0_i32_0 : i32, i32, i32
  }
  func.func @transform_1(%arg0: i32) -> (i32, i32, i32) {
    %c0_i32 = arith.constant 0 : i32
    %c0_i32_0 = arith.constant 0 : i32
    %c0_i32_1 = arith.constant 0 : i32
    return %arg0, %c0_i32, %c0_i32_0 : i32, i32, i32
  }
  func.func @transform_2(%arg0: i32) -> (i32, i32) {
    %c0_i32 = arith.constant 0 : i32
    %c0_i32_0 = arith.constant 0 : i32
    %c0_i32_1 = arith.constant 0 : i32
    return %c0_i32, %c0_i32_0 : i32, i32
  }
  func.func @transform_3(%arg0: i32) -> (i32, i32) {
    %c0_i32 = arith.constant 0 : i32
    %c0_i32_0 = arith.constant 0 : i32
    %c0_i32_1 = arith.constant 0 : i32
    return %c0_i32, %c0_i32_0 : i32, i32
  }
  func.func @transform_4(%arg0: i32) -> (i32, i32) {
    %c0_i32 = arith.constant 0 : i32
    %c0_i32_0 = arith.constant 0 : i32
    %c0_i32_1 = arith.constant 0 : i32
    return %c0_i32, %c0_i32_0 : i32, i32
  }
  func.func @transform_5(%arg0: i32) -> (i32, i32) {
    %c0_i32 = arith.constant 0 : i32
    %c0_i32_0 = arith.constant 0 : i32
    %c0_i32_1 = arith.constant 0 : i32
    return %c0_i32, %c0_i32_0 : i32, i32
  }
  func.func @transform_6(%arg0: i32) -> (i32, i32, i32) {
    %c0_i32 = arith.constant 0 : i32
    %c0_i32_0 = arith.constant 0 : i32
    %c0_i32_1 = arith.constant 0 : i32
    return %arg0, %c0_i32, %c0_i32_0 : i32, i32, i32
  }
}

</mosaic_0001>

<llo_original>
// kernel: residual_block.3
$region0: #{residual_block.3}
  #allocation0 [shape = 'u32[]', space=smem, size = 0x4, offset = 0x4, fixed_abs, tag = 'smem constant byte address 0x4 - core index']
  #allocation1 [shape = 'u32[144,128]{1,0:T(1,128)}', space=vmem, size = 0x12000, scoped, tag = 'internal scratch']
  %s0 = inlined_call_operand.vmem [shape: f32[2,4,16], index: 0, kind: input, shape index: {}]
  %s1 = inlined_call_operand.vmem [shape: bf16[8,12], index: 1, kind: input, shape index: {}]
  %s2 = inlined_call_operand.vmem [shape: bf16[2,8,16], index: 2, kind: output, shape index: {0}]
  %s3 = inlined_call_operand.vmem [shape: f32[2,8,2], index: 3, kind: output, shape index: {1}]
  %4 = xla_tuple %s2, %s3
  %s5 = sld [smem:[#allocation0]]
  $region49: #{residual_block.3} parent=0
    _
  %s7 = ssub.s32 1, %s5
  %s8 = scalar_select 0, %s7, %s5
  loop: start=0, step=1, limit=4
  $region2: #{residual_block.3} parent=0 // loop_pre_header
    _
  $region3: #{residual_block.3} parent=0 // loop_header
    %s10 = sphi 0, %s14
    %p11 = scmp.ge.s32.totalorder %s10, 4
    %s20 = sphi 0, %s22
    %s23 = sphi 0, %s20
    %s24 = sphi 0, %s23
    %s40 = sphi 0, %s24
    %s44 = sphi 0, %s44
    %s46 = sphi 0, %s44
    %s47 = sphi 0, %s46
    %s61 = sphi 0, %s47
    %s67 = sphi 0, %s69
    %s70 = sphi 0, %s67
    %s71 = sphi 0, %s70
    %s87 = sphi 0, %s71
    %s93 = sphi 0, %s95
    %s96 = sphi 0, %s93
    %s97 = sphi 0, %s96
    %s113 = sphi 0, %s97
  $region4: #{residual_block.3} parent=0 // loop_header_branch
    %13 = sbr.rel (%p11) target = $region8
  $region5: #{residual_block.3} parent=0 // loop_body
    %s15 = ssub.s32 %s10, 1
    %s16 = ssub.s32 %s10, 2
    %s17 = sadd.s32 %s10, 1
    %s18 = ssub.s32 %s10, %s17
    %p19 = scmp.eq.s32.totalorder %s18, 0
    %s21 = sadd.s32 %s20, 1
    %s22 = scalar_select %p19, %s20, %s21
    %p25 = pneg %p19
    %p26 = scmp.eq.s32.totalorder %s10, 1
    %p27 = por %p25, %p26
    %p28 = scmp.ne.s32.totalorder %s20, %s23
    %p29 = scmp.eq.s32.totalorder %s10, 0
    %p30 = por %p28, %p29
    %p31 = scmp.ne.s32.totalorder %s20, %s23
    %p32 = scmp.eq.s32.totalorder %s15, 1
    %p33 = por %p31, %p32
    %p34 = scmp.ne.s32.totalorder %s23, %s24
    %p35 = scmp.eq.s32.totalorder %s15, 0
    %p36 = por %p34, %p35
    %p37 = scmp.ne.s32.totalorder %s23, %s24
    %p38 = scmp.eq.s32.totalorder %s16, 1
    %p39 = por %p37, %p38
    %p41 = scmp.ne.s32.totalorder %s24, %s40
    %p42 = scmp.eq.s32.totalorder %s16, 0
    %p43 = por %p41, %p42
    %s45 = sadd.s32 %s44, 1
    %p48 = scmp.eq.s32.totalorder %s10, 1
    %p49 = scmp.ne.s32.totalorder %s44, %s46
    %p50 = scmp.eq.s32.totalorder %s10, 0
    %p51 = por %p49, %p50
    %p52 = scmp.ne.s32.totalorder %s44, %s46
    %p53 = scmp.eq.s32.totalorder %s15, 1
    %p54 = por %p52, %p53
    %p55 = scmp.ne.s32.totalorder %s46, %s47
    %p56 = scmp.eq.s32.totalorder %s15, 0
    %p57 = por %p55, %p56
    %p58 = scmp.ne.s32.totalorder %s46, %s47
    %p59 = scmp.eq.s32.totalorder %s16, 1
    %p60 = por %p58, %p59
    %p62 = scmp.ne.s32.totalorder %s47, %s61
    %p63 = scmp.eq.s32.totalorder %s16, 0
    %p64 = por %p62, %p63
    %s65 = ssub.s32 %s10, %s17
    %p66 = scmp.eq.s32.totalorder %s65, 0
    %s68 = sadd.s32 %s67, 1
    %s69 = scalar_select %p66, %s67, %s68
    %p72 = pneg %p66
    %p73 = scmp.eq.s32.totalorder %s10, 1
    %p74 = por %p72, %p73
    %p75 = scmp.ne.s32.totalorder %s67, %s70
    %p76 = scmp.eq.s32.totalorder %s10, 0
    %p77 = por %p75, %p76
    %p78 = scmp.ne.s32.totalorder %s67, %s70
    %p79 = scmp.eq.s32.totalorder %s15, 1
    %p80 = por %p78, %p79
    %p81 = scmp.ne.s32.totalorder %s70, %s71
    %p82 = scmp.eq.s32.totalorder %s15, 0
    %p83 = por %p81, %p82
    %p84 = scmp.ne.s32.totalorder %s70, %s71
    %p85 = scmp.eq.s32.totalorder %s16, 1
    %p86 = por %p84, %p85
    %p88 = scmp.ne.s32.totalorder %s71, %s87
    %p89 = scmp.eq.s32.totalorder %s16, 0
    %p90 = por %p88, %p89
    %s91 = ssub.s32 %s10, %s17
    %p92 = scmp.eq.s32.totalorder %s91, 0
    %s94 = sadd.s32 %s93, 1
    %s95 = scalar_select %p92, %s93, %s94
    %p98 = pneg %p92
    %p99 = scmp.eq.s32.totalorder %s10, 1
    %p100 = por %p98, %p99
    %p101 = scmp.ne.s32.totalorder %s93, %s96
    %p102 = scmp.eq.s32.totalorder %s10, 0
    %p103 = por %p101, %p102
    %p104 = scmp.ne.s32.totalorder %s93, %s96
    %p105 = scmp.eq.s32.totalorder %s15, 1
    %p106 = por %p104, %p105
    %p107 = scmp.ne.s32.totalorder %s96, %s97
    %p108 = scmp.eq.s32.totalorder %s15, 0
    %p109 = por %p107, %p108
    %p110 = scmp.ne.s32.totalorder %s96, %s97
    %p111 = scmp.eq.s32.totalorder %s16, 1
    %p112 = por %p110, %p111
    %p114 = scmp.ne.s32.totalorder %s97, %s113
    %p115 = scmp.eq.s32.totalorder %s16, 0
    %p116 = por %p114, %p115
    %p117 = scmp.le.s32.totalorder 1, %s10
    %p118 = scmp.lt.s32.totalorder %s10, 3
    %p119 = pnand %p117, %p118
    %p120 = pneg %p119
    // Predicated region
    $region9: #{residual_block.3} parent=5 // pred_check
      _
    $region10: #{residual_block.3} parent=5 // pred_check_branch
      %122 = sbr.rel (%p119) target = $region12
    $region11: #{residual_block.3} parent=5 // pred_region
      %s123 = ssub.s32 %s10, 1
      // Predicated region
      $region13: #{residual_block.3} parent=11 // pred_check
        %p124 = pneg %p57
      $region14: #{residual_block.3} parent=11 // pred_check_branch
        %126 = sbr.rel (%p124) target = $region16
      $region15: #{residual_block.3} parent=11 // pred_region
        _
      $region16: #{residual_block.3} parent=11 // pred_fallthru
        _
    $region12: #{residual_block.3} parent=5 // pred_fallthru
      _
    %p127 = scmp.lt.s32.totalorder %s10, 2
    // Predicated region
    $region17: #{residual_block.3} parent=5 // pred_check
      %p128 = pneg %p127
    $region18: #{residual_block.3} parent=5 // pred_check_branch
      %130 = sbr.rel (%p128) target = $region20
    $region19: #{residual_block.3} parent=5 // pred_region
      // Predicated region
      $region21: #{residual_block.3} parent=19 // pred_check
        %p131 = pneg %p30
      $region22: #{residual_block.3} parent=19 // pred_check_branch
        %133 = sbr.rel (%p131) target = $region24
      $region23: #{residual_block.3} parent=19 // pred_region
        %p134 = scmp.lt.s32.totalorder %s10, 1
        %s135 = scalar_select %p134, %s10, 1
        %s136 = smul.addr %s135, 4
        %s137 = scalar_lea.vmem %s0, %s136
      $region24: #{residual_block.3} parent=19 // pred_fallthru
        _
    $region20: #{residual_block.3} parent=5 // pred_fallthru
      _
    %p138 = scmp.le.s32.totalorder 1, %s10
    %p139 = scmp.lt.s32.totalorder %s10, 3
    %p140 = pnand %p138, %p139
    %p141 = pneg %p140
    // Predicated region
    $region25: #{residual_block.3} parent=5 // pred_check
      _
    $region26: #{residual_block.3} parent=5 // pred_check_branch
      %143 = sbr.rel (%p140) target = $region28
    $region27: #{residual_block.3} parent=5 // pred_region
      %s144 = ssub.s32 %s10, 1
      %p145 = scmp.lt.s32.totalorder %s15, 1
      %s146 = scalar_select %p145, %s15, 1
      %s147 = smul.addr %s146, 4
      %s148 = scalar_lea.vmem %s0, %s147
      %p149 = pneg %p36
      %p150 = pneg %p33
      %p151 = pneg %p57
      %p152 = pneg %p54
      %p153 = pneg %p83
      %p154 = pneg %p80
      %p155 = scmp.lt.s32.totalorder %s15, 1
      %s156 = scalar_select %p155, %s15, 1
      %s157 = smul.addr %s156, 4
      %s158 = scalar_lea.vmem %s2, %s157
      %p159 = pneg %p109
      %p160 = pneg %p106
      %p161 = scmp.lt.s32.totalorder %s15, 1
      %s162 = scalar_select %p161, %s15, 1
      %s163 = smul.addr %s162, 8
      %s164 = scalar_lea.vmem %s3, %s163
      %p165 = scmp.lt.s32.totalorder %s15, 1
      %s166 = scalar_select %p165, %s15, 1
      %s167 = smul.addr %s166, 4
      %s168 = scalar_lea.vmem %s0, %s167
      %p169 = scmp.lt.s32.totalorder %s15, 1
      %s170 = scalar_select %p169, %s15, 1
      %s171 = smul.addr %s170, 4
      %s172 = scalar_lea.vmem %s2, %s171
      %p173 = scmp.lt.s32.totalorder %s15, 1
      %s174 = scalar_select %p173, %s15, 1
      %s175 = smul.addr %s174, 8
      %s176 = scalar_lea.vmem %s3, %s175
      %v178 = vld [vmem:[%s168] sm:$0xf]
      %v179 = vpack.c.bf16 %v178, %v178
      %181 = vrot.lane.b32.xlu0 %v179, 1
      %v182 = vpop.permute.xlu0 %181
      %vm183 = vcmask 7168
      %v186 = vsel %vm183, 0, %v182
      %187 = vrot.lane.b32.xlu0 %v179, 127
      %v188 = vpop.permute.xlu0 %187
      %vm189 = vcmask 121856
      %v191 = vsel %vm189, %v188, 0
      %v192 = vrot.slane %v179, 6
      %v194 = vrot.slane %v191, 4
      %vm195 = vcmask 1041408
      %v197 = vsel %vm195, %v186, %v192
      %vm198 = vcmask 1043456
      %v200 = vsel %vm198, %v197, %v194
      %v201 = vld [vmem:[%s1] sm:$0xf]
      %vm202 = vcmask 97280
      %v204 = vsel %vm202, %v201, 0
      %vm206 = vcmask 1045504
      %v207 = vsel %vm206, %v200, 0
      %209 = vmatprep.subr.bf16.mxu0 0
      %210 = vmatpush1.bf16.msra.mxu0 %v207
      %211 = vmatprep.subr.bf16.mxu0 0
      %212 = vmatpush1.bf16.msra.mxu0 0
      %213 = vmatprep.subr.bf16.mxu0 0
      %214 = vmatpush1.bf16.msra.mxu0 0
      %215 = vmatprep.subr.bf16.mxu0 0
      %216 = vmatpush1.bf16.msra.mxu0 0
      %217 = vmatprep.subr.bf16.mxu0 0
      %218 = vmatpush1.bf16.msra.mxu0 0
      %219 = vmatprep.subr.bf16.mxu0 0
      %220 = vmatpush1.bf16.msra.mxu0 0
      %221 = vmatprep.subr.bf16.mxu0 0
      %222 = vmatpush1.bf16.msra.mxu0 0
      %223 = vmatprep.subr.bf16.mxu0 0
      %224 = vmatpush1.bf16.msra.mxu0 0
      %225 = vmatprep.subr.bf16.mxu0 0
      %226 = vmatpush1.bf16.msra.mxu0 0
      %227 = vmatprep.subr.bf16.mxu0 0
      %228 = vmatpush1.bf16.msra.mxu0 0
      %229 = vmatprep.subr.bf16.mxu0 0
      %230 = vmatpush1.bf16.msra.mxu0 0
      %231 = vmatprep.subr.bf16.mxu0 0
      %232 = vmatpush1.bf16.msra.mxu0 0
      %233 = vmatprep.subr.bf16.mxu0 0
      %234 = vmatpush1.bf16.msra.mxu0 0
      %235 = vmatprep.subr.bf16.mxu0 0
      %236 = vmatpush1.bf16.msra.mxu0 0
      %237 = vmatprep.subr.bf16.mxu0 0
      %238 = vmatpush1.bf16.msra.mxu0 0
      %239 = vmatprep.subr.bf16.mxu0 0
      %240 = vmatpush1.bf16.msra.mxu0 0
      %241 = vmatprep.mubr.bf16.mxu0 0
      %242 = vmatmul.mubr.bf16.gmra.mrb[0].mxu0 %v204
      %v243 = vpop.f32.mrb[0].mxu0
      %v244 = vadd.f32 0.0, %v243
      %v245 = vpop.f32.mrb[0].mxu0
      %v246 = vpop.f32.mrb[0].mxu0
      %v247 = vpop.f32.mrb[0].mxu0
      %248 = vdwg.mxu0
      %vm249 = vcmask 130048
      %v250 = vsel %vm249, %v244, 0.0
      %251 = vadd.xlane.f32.xlu0 %v250
      %v252 = vpop.xlane.xlu0 %251
      %v253 = vmul.f32 %v244, %v244
      %v254 = vsel %vm249, %v253, 0.0
      %255 = vadd.xlane.f32.xlu0 %v254
      %v256 = vpop.xlane.xlu0 %255
      %v257 = vsel %vm183, %v252, %v256
      %v258 = vadd.f32 %v257, 0.0
      %v259 = vpack.c.bf16 %v244, %v244
      %vm260 = vcmask 125952
      %261 = vst.msk [vmem:[%s172] sm:$0xf] %vm260, %v259
      %vm262 = vcmask 15360
      %263 = vst.msk [vmem:[%s176] sm:$0xff] %vm262, %v258
      %p264 = scmp.lt.s32.totalorder %s15, 1
      %s265 = scalar_select %p264, %s15, 1
      %s266 = smul.addr %s265, 4
      %s267 = scalar_lea.vmem %s2, %s266
      %p268 = scmp.lt.s32.totalorder %s15, 1
      %s269 = scalar_select %p268, %s15, 1
      %s270 = smul.addr %s269, 8
      %s271 = scalar_lea.vmem %s3, %s270
      // Predicated region
      $region29: #{residual_block.3} parent=27 // pred_check
        %p272 = pneg %p80
      $region30: #{residual_block.3} parent=27 // pred_check_branch
        %274 = sbr.rel (%p272) target = $region32
      $region31: #{residual_block.3} parent=27 // pred_region
        _
      $region32: #{residual_block.3} parent=27 // pred_fallthru
        _
      // Predicated region
      $region33: #{residual_block.3} parent=27 // pred_check
        %p275 = pneg %p106
      $region34: #{residual_block.3} parent=27 // pred_check_branch
        %277 = sbr.rel (%p275) target = $region36
      $region35: #{residual_block.3} parent=27 // pred_region
        _
      $region36: #{residual_block.3} parent=27 // pred_fallthru
        _
    $region28: #{residual_block.3} parent=5 // pred_fallthru
      _
    %p278 = scmp.le.s32.totalorder 2, %s10
    // Predicated region
    $region37: #{residual_block.3} parent=5 // pred_check
      %p279 = pneg %p278
    $region38: #{residual_block.3} parent=5 // pred_check_branch
      %281 = sbr.rel (%p279) target = $region40
    $region39: #{residual_block.3} parent=5 // pred_region
      %s282 = ssub.s32 %s10, 2
      // Predicated region
      $region41: #{residual_block.3} parent=39 // pred_check
        %p283 = pneg %p86
      $region42: #{residual_block.3} parent=39 // pred_check_branch
        %285 = sbr.rel (%p283) target = $region44
      $region43: #{residual_block.3} parent=39 // pred_region
        %p286 = scmp.lt.s32.totalorder %s16, 1
        %s287 = scalar_select %p286, %s16, 1
        %s288 = smul.addr %s287, 4
        %s289 = scalar_lea.vmem %s2, %s288
      $region44: #{residual_block.3} parent=39 // pred_fallthru
        _
      // Predicated region
      $region45: #{residual_block.3} parent=39 // pred_check
        %p290 = pneg %p112
      $region46: #{residual_block.3} parent=39 // pred_check_branch
        %292 = sbr.rel (%p290) target = $region48
      $region47: #{residual_block.3} parent=39 // pred_region
        %p293 = scmp.lt.s32.totalorder %s16, 1
        %s294 = scalar_select %p293, %s16, 1
        %s295 = smul.addr %s294, 8
        %s296 = scalar_lea.vmem %s3, %s295
      $region48: #{residual_block.3} parent=39 // pred_fallthru
        _
    $region40: #{residual_block.3} parent=5 // pred_fallthru
      _
  $region6: #{residual_block.3} parent=0 // loop_footer
    %s14 = sadd.s32 1, %s10
  $region7: #{residual_block.3} parent=0 // loop_footer_branch
    %9 = sbr.rel target = $region3
  $region8: #{residual_block.3} parent=0 // loop_exit
    _

// kernel: residual_block.5
$region0: #{residual_block.5}
  #allocation0 [shape = 'u32[]', space=smem, size = 0x4, offset = 0x4, fixed_abs, tag = 'smem constant byte address 0x4 - core index']
  #allocation1 [shape = 'u32[144,128]{1,0:T(1,128)}', space=vmem, size = 0x12000, scoped, tag = 'internal scratch']
  %s0 = inlined_call_operand.vmem [shape: bf16[2,8,16], index: 0, kind: input, shape index: {}]
  %s1 = inlined_call_operand.vmem [shape: f32[2,4,16], index: 1, kind: input, shape index: {}]
  %s2 = inlined_call_operand.vmem [shape: f32[8,1], index: 2, kind: input, shape index: {}]
  %s3 = inlined_call_operand.vmem [shape: f32[8,1], index: 3, kind: input, shape index: {}]
  %s4 = inlined_call_operand.vmem [shape: bf16[8,4], index: 4, kind: input, shape index: {}]
  %s5 = inlined_call_operand.vmem [shape: f32[8,1], index: 5, kind: input, shape index: {}]
  %s6 = inlined_call_operand.hbm [shape: f32[2,8,16], index: 6, kind: output, shape index: {}]
  %s7 = sld [smem:[#allocation0]]
  $region57: #{residual_block.5} parent=0
    _
  %s9 = ssub.s32 1, %s7
  %s10 = scalar_select 0, %s9, %s7
  $region1: #{residual_block.5} parent=0
    #allocation2 [shape = 'u8[8192]{0}', space=vmem, size = 0x2000, scoped, tag = 'output window, operand 0']
    #allocation3 [shape = 's32[2]{0}', space=sflag, size = 0x8, scoped, tag = 'scoped memory for residual_block.5']
    %11 = vsyncpa [#allocation3], 0
    %s12 = scalar_lea.sflag [#allocation3], 1
    %13 = vsyncpa %s12, 0
    loop: start=0, step=1, limit=4
    $region2: #{residual_block.5} parent=1 // loop_pre_header
      _
    $region3: #{residual_block.5} parent=1 // loop_header
      %s15 = sphi 0, %s19
      %p16 = scmp.ge.s32.totalorder %s15, 4
      %s25 = sphi 0, %s27
      %s28 = sphi 0, %s25
      %s29 = sphi 0, %s28
      %s45 = sphi 0, %s29
      %s51 = sphi 0, %s53
      %s54 = sphi 0, %s51
      %s55 = sphi 0, %s54
      %s71 = sphi 0, %s55
      %s75 = sphi 0, %s75
      %s77 = sphi 0, %s75
      %s78 = sphi 0, %s77
      %s92 = sphi 0, %s78
      %s96 = sphi 0, %s96
      %s98 = sphi 0, %s96
      %s99 = sphi 0, %s98
      %s113 = sphi 0, %s99
      %s117 = sphi 0, %s117
      %s119 = sphi 0, %s117
      %s120 = sphi 0, %s119
      %s134 = sphi 0, %s120
      %s138 = sphi 0, %s138
      %s140 = sphi 0, %s138
      %s141 = sphi 0, %s140
      %s155 = sphi 0, %s141
      %s161 = sphi 0, %s163
      %s164 = sphi 0, %s161
      %s165 = sphi 0, %s164
      %s181 = sphi 0, %s165
    $region4: #{residual_block.5} parent=1 // loop_header_branch
      %18 = sbr.rel (%p16) target = $region8
    $region5: #{residual_block.5} parent=1 // loop_body
      %s20 = ssub.s32 %s15, 1
      %s21 = ssub.s32 %s15, 2
      %s22 = sadd.s32 %s15, 1
      %s23 = ssub.s32 %s15, %s22
      %p24 = scmp.eq.s32.totalorder %s23, 0
      %s26 = sadd.s32 %s25, 1
      %s27 = scalar_select %p24, %s25, %s26
      %p30 = pneg %p24
      %p31 = scmp.eq.s32.totalorder %s15, 1
      %p32 = por %p30, %p31
      %p33 = scmp.ne.s32.totalorder %s25, %s28
      %p34 = scmp.eq.s32.totalorder %s15, 0
      %p35 = por %p33, %p34
      %p36 = scmp.ne.s32.totalorder %s25, %s28
      %p37 = scmp.eq.s32.totalorder %s20, 1
      %p38 = por %p36, %p37
      %p39 = scmp.ne.s32.totalorder %s28, %s29
      %p40 = scmp.eq.s32.totalorder %s20, 0
      %p41 = por %p39, %p40
      %p42 = scmp.ne.s32.totalorder %s28, %s29
      %p43 = scmp.eq.s32.totalorder %s21, 1
      %p44 = por %p42, %p43
      %p46 = scmp.ne.s32.totalorder %s29, %s45
      %p47 = scmp.eq.s32.totalorder %s21, 0
      %p48 = por %p46, %p47
      %s49 = ssub.s32 %s15, %s22
      %p50 = scmp.eq.s32.totalorder %s49, 0
      %s52 = sadd.s32 %s51, 1
      %s53 = scalar_select %p50, %s51, %s52
      %p56 = pneg %p50
      %p57 = scmp.eq.s32.totalorder %s15, 1
      %p58 = por %p56, %p57
      %p59 = scmp.ne.s32.totalorder %s51, %s54
      %p60 = scmp.eq.s32.totalorder %s15, 0
      %p61 = por %p59, %p60
      %p62 = scmp.ne.s32.totalorder %s51, %s54
      %p63 = scmp.eq.s32.totalorder %s20, 1
      %p64 = por %p62, %p63
      %p65 = scmp.ne.s32.totalorder %s54, %s55
      %p66 = scmp.eq.s32.totalorder %s20, 0
      %p67 = por %p65, %p66
      %p68 = scmp.ne.s32.totalorder %s54, %s55
      %p69 = scmp.eq.s32.totalorder %s21, 1
      %p70 = por %p68, %p69
      %p72 = scmp.ne.s32.totalorder %s55, %s71
      %p73 = scmp.eq.s32.totalorder %s21, 0
      %p74 = por %p72, %p73
      %s76 = sadd.s32 %s75, 1
      %p79 = scmp.eq.s32.totalorder %s15, 1
      %p80 = scmp.ne.s32.totalorder %s75, %s77
      %p81 = scmp.eq.s32.totalorder %s15, 0
      %p82 = por %p80, %p81
      %p83 = scmp.ne.s32.totalorder %s75, %s77
      %p84 = scmp.eq.s32.totalorder %s20, 1
      %p85 = por %p83, %p84
      %p86 = scmp.ne.s32.totalorder %s77, %s78
      %p87 = scmp.eq.s32.totalorder %s20, 0
      %p88 = por %p86, %p87
      %p89 = scmp.ne.s32.totalorder %s77, %s78
      %p90 = scmp.eq.s32.totalorder %s21, 1
      %p91 = por %p89, %p90
      %p93 = scmp.ne.s32.totalorder %s78, %s92
      %p94 = scmp.eq.s32.totalorder %s21, 0
      %p95 = por %p93, %p94
      %s97 = sadd.s32 %s96, 1
      %p100 = scmp.eq.s32.totalorder %s15, 1
      %p101 = scmp.ne.s32.totalorder %s96, %s98
      %p102 = scmp.eq.s32.totalorder %s15, 0
      %p103 = por %p101, %p102
      %p104 = scmp.ne.s32.totalorder %s96, %s98
      %p105 = scmp.eq.s32.totalorder %s20, 1
      %p106 = por %p104, %p105
      %p107 = scmp.ne.s32.totalorder %s98, %s99
      %p108 = scmp.eq.s32.totalorder %s20, 0
      %p109 = por %p107, %p108
      %p110 = scmp.ne.s32.totalorder %s98, %s99
      %p111 = scmp.eq.s32.totalorder %s21, 1
      %p112 = por %p110, %p111
      %p114 = scmp.ne.s32.totalorder %s99, %s113
      %p115 = scmp.eq.s32.totalorder %s21, 0
      %p116 = por %p114, %p115
      %s118 = sadd.s32 %s117, 1
      %p121 = scmp.eq.s32.totalorder %s15, 1
      %p122 = scmp.ne.s32.totalorder %s117, %s119
      %p123 = scmp.eq.s32.totalorder %s15, 0
      %p124 = por %p122, %p123
      %p125 = scmp.ne.s32.totalorder %s117, %s119
      %p126 = scmp.eq.s32.totalorder %s20, 1
      %p127 = por %p125, %p126
      %p128 = scmp.ne.s32.totalorder %s119, %s120
      %p129 = scmp.eq.s32.totalorder %s20, 0
      %p130 = por %p128, %p129
      %p131 = scmp.ne.s32.totalorder %s119, %s120
      %p132 = scmp.eq.s32.totalorder %s21, 1
      %p133 = por %p131, %p132
      %p135 = scmp.ne.s32.totalorder %s120, %s134
      %p136 = scmp.eq.s32.totalorder %s21, 0
      %p137 = por %p135, %p136
      %s139 = sadd.s32 %s138, 1
      %p142 = scmp.eq.s32.totalorder %s15, 1
      %p143 = scmp.ne.s32.totalorder %s138, %s140
      %p144 = scmp.eq.s32.totalorder %s15, 0
      %p145 = por %p143, %p144
      %p146 = scmp.ne.s32.totalorder %s138, %s140
      %p147 = scmp.eq.s32.totalorder %s20, 1
      %p148 = por %p146, %p147
      %p149 = scmp.ne.s32.totalorder %s140, %s141
      %p150 = scmp.eq.s32.totalorder %s20, 0
      %p151 = por %p149, %p150
      %p152 = scmp.ne.s32.totalorder %s140, %s141
      %p153 = scmp.eq.s32.totalorder %s21, 1
      %p154 = por %p152, %p153
      %p156 = scmp.ne.s32.totalorder %s141, %s155
      %p157 = scmp.eq.s32.totalorder %s21, 0
      %p158 = por %p156, %p157
      %s159 = ssub.s32 %s15, %s22
      %p160 = scmp.eq.s32.totalorder %s159, 0
      %s162 = sadd.s32 %s161, 1
      %s163 = scalar_select %p160, %s161, %s162
      %p166 = pneg %p160
      %p167 = scmp.eq.s32.totalorder %s15, 1
      %p168 = por %p166, %p167
      %p169 = scmp.ne.s32.totalorder %s161, %s164
      %p170 = scmp.eq.s32.totalorder %s15, 0
      %p171 = por %p169, %p170
      %p172 = scmp.ne.s32.totalorder %s161, %s164
      %p173 = scmp.eq.s32.totalorder %s20, 1
      %p174 = por %p172, %p173
      %p175 = scmp.ne.s32.totalorder %s164, %s165
      %p176 = scmp.eq.s32.totalorder %s20, 0
      %p177 = por %p175, %p176
      %p178 = scmp.ne.s32.totalorder %s164, %s165
      %p179 = scmp.eq.s32.totalorder %s21, 1
      %p180 = por %p178, %p179
      %p182 = scmp.ne.s32.totalorder %s165, %s181
      %p183 = scmp.eq.s32.totalorder %s21, 0
      %p184 = por %p182, %p183
      %p185 = scmp.le.s32.totalorder 1, %s15
      %p186 = scmp.lt.s32.totalorder %s15, 3
      %p187 = pnand %p185, %p186
      %p188 = pneg %p187
      // Predicated region
      $region9: #{residual_block.5} parent=5 // pred_check
        _
      $region10: #{residual_block.5} parent=5 // pred_check_branch
        %190 = sbr.rel (%p187) target = $region12
      $region11: #{residual_block.5} parent=5 // pred_region
        %s191 = ssub.s32 %s15, 1
        // Predicated region
        $region13: #{residual_block.5} parent=11 // pred_check
          %p192 = pneg %p88
        $region14: #{residual_block.5} parent=11 // pred_check_branch
          %194 = sbr.rel (%p192) target = $region16
        $region15: #{residual_block.5} parent=11 // pred_region
          _
        $region16: #{residual_block.5} parent=11 // pred_fallthru
          _
        // Predicated region
        $region17: #{residual_block.5} parent=11 // pred_check
          %p195 = pneg %p109
        $region18: #{residual_block.5} parent=11 // pred_check_branch
          %197 = sbr.rel (%p195) target = $region20
        $region19: #{residual_block.5} parent=11 // pred_region
          _
        $region20: #{residual_block.5} parent=11 // pred_fallthru
          _
        // Predicated region
        $region21: #{residual_block.5} parent=11 // pred_check
          %p198 = pneg %p130
        $region22: #{residual_block.5} parent=11 // pred_check_branch
          %200 = sbr.rel (%p198) target = $region24
        $region23: #{residual_block.5} parent=11 // pred_region
          _
        $region24: #{residual_block.5} parent=11 // pred_fallthru
          _
        // Predicated region
        $region25: #{residual_block.5} parent=11 // pred_check
          %p201 = pneg %p151
        $region26: #{residual_block.5} parent=11 // pred_check_branch
          %203 = sbr.rel (%p201) target = $region28
        $region27: #{residual_block.5} parent=11 // pred_region
          _
        $region28: #{residual_block.5} parent=11 // pred_fallthru
          _
      $region12: #{residual_block.5} parent=5 // pred_fallthru
        _
      %p204 = scmp.lt.s32.totalorder %s15, 2
      // Predicated region
      $region29: #{residual_block.5} parent=5 // pred_check
        %p205 = pneg %p204
      $region30: #{residual_block.5} parent=5 // pred_check_branch
        %207 = sbr.rel (%p205) target = $region32
      $region31: #{residual_block.5} parent=5 // pred_region
        // Predicated region
        $region33: #{residual_block.5} parent=31 // pred_check
          %p208 = pneg %p35
        $region34: #{residual_block.5} parent=31 // pred_check_branch
          %210 = sbr.rel (%p208) target = $region36
        $region35: #{residual_block.5} parent=31 // pred_region
          %p211 = scmp.lt.s32.totalorder %s15, 1
          %s212 = scalar_select %p211, %s15, 1
          %s213 = smul.addr %s212, 4
          %s214 = scalar_lea.vmem %s0, %s213
        $region36: #{residual_block.5} parent=31 // pred_fallthru
          _
        // Predicated region
        $region37: #{residual_block.5} parent=31 // pred_check
          %p215 = pneg %p61
        $region38: #{residual_block.5} parent=31 // pred_check_branch
          %217 = sbr.rel (%p215) target = $region40
        $region39: #{residual_block.5} parent=31 // pred_region
          %p218 = scmp.lt.s32.totalorder %s15, 1
          %s219 = scalar_select %p218, %s15, 1
          %s220 = smul.addr %s219, 4
          %s221 = scalar_lea.vmem %s1, %s220
        $region40: #{residual_block.5} parent=31 // pred_fallthru
          _
      $region32: #{residual_block.5} parent=5 // pred_fallthru
        _
      %p222 = scmp.le.s32.totalorder 1, %s15
      %p223 = scmp.lt.s32.totalorder %s15, 3
      %p224 = pnand %p222, %p223
      %p225 = pneg %p224
      // Predicated region
      $region41: #{residual_block.5} parent=5 // pred_check
        _
      $region42: #{residual_block.5} parent=5 // pred_check_branch
        %227 = sbr.rel (%p224) target = $region44
      $region43: #{residual_block.5} parent=5 // pred_region
        %s228 = ssub.s32 %s15, 1
        %p229 = scmp.lt.s32.totalorder %s20, 1
        %s230 = scalar_select %p229, %s20, 1
        %s231 = smul.addr %s230, 4
        %s232 = scalar_lea.vmem %s0, %s231
        %p233 = pneg %p41
        %p234 = pneg %p38
        %p235 = scmp.lt.s32.totalorder %s20, 1
        %s236 = scalar_select %p235, %s20, 1
        %s237 = smul.addr %s236, 4
        %s238 = scalar_lea.vmem %s1, %s237
        %p239 = pneg %p67
        %p240 = pneg %p64
        %p241 = pneg %p88
        %p242 = pneg %p85
        %p243 = pneg %p109
        %p244 = pneg %p106
        %p245 = pneg %p130
        %p246 = pneg %p127
        %p247 = pneg %p151
        %p248 = pneg %p148
        %p249 = pneg %p177
        %p250 = pneg %p174
        %s251 = sand.u32 %s164, 1
        %s252 = scalar_lea.sflag [#allocation3], %s251
        %s253 = sand.u32 %s164, 1
        %s254 = smul.addr %s253, 8
        %s255 = scalar_lea.vmem [#allocation2], %s254
        %p256 = scmp.lt.s32.totalorder %s20, 1
        %s257 = scalar_select %p256, %s20, 1
        %s258 = smul.addr %s257, 4
        %s259 = scalar_lea.vmem %s0, %s258
        %p260 = scmp.lt.s32.totalorder %s20, 1
        %s261 = scalar_select %p260, %s20, 1
        %s262 = smul.addr %s261, 4
        %s263 = scalar_lea.vmem %s1, %s262
        %v265 = vld [vmem:[%s4] sm:$0xf]
        %v266 = vld [vmem:[%s263] sm:$0xf]
        %v267 = vpack.c.bf16 %v266, %v266
        %v268 = vld [vmem:[%s5] sm:$0xff]
        %270 = vset.pattern.permute.xlu0 0
        %271 = vperm.xlu0 %270, %v268
        %v272 = vpop.permute.xlu0 %271
        %vm274 = vcmask 31744
        %v276 = vsel %vm274, %v265, 0
        %vm278 = vcmask 1041408
        %v280 = vsel %vm278, %v267, 0
        %282 = vmatprep.subr.bf16.mxu0 0
        %283 = vmatpush1.bf16.msra.mxu0 %v280
        %284 = vmatprep.subr.bf16.mxu0 0
        %285 = vmatpush1.bf16.msra.mxu0 0
        %286 = vmatprep.subr.bf16.mxu0 0
        %287 = vmatpush1.bf16.msra.mxu0 0
        %288 = vmatprep.subr.bf16.mxu0 0
        %289 = vmatpush1.bf16.msra.mxu0 0
        %290 = vmatprep.subr.bf16.mxu0 0
        %291 = vmatpush1.bf16.msra.mxu0 0
        %292 = vmatprep.subr.bf16.mxu0 0
        %293 = vmatpush1.bf16.msra.mxu0 0
        %294 = vmatprep.subr.bf16.mxu0 0
        %295 = vmatpush1.bf16.msra.mxu0 0
        %296 = vmatprep.subr.bf16.mxu0 0
        %297 = vmatpush1.bf16.msra.mxu0 0
        %298 = vmatprep.subr.bf16.mxu0 0
        %299 = vmatpush1.bf16.msra.mxu0 0
        %300 = vmatprep.subr.bf16.mxu0 0
        %301 = vmatpush1.bf16.msra.mxu0 0
        %302 = vmatprep.subr.bf16.mxu0 0
        %303 = vmatpush1.bf16.msra.mxu0 0
        %304 = vmatprep.subr.bf16.mxu0 0
        %305 = vmatpush1.bf16.msra.mxu0 0
        %306 = vmatprep.subr.bf16.mxu0 0
        %307 = vmatpush1.bf16.msra.mxu0 0
        %308 = vmatprep.subr.bf16.mxu0 0
        %309 = vmatpush1.bf16.msra.mxu0 0
        %310 = vmatprep.subr.bf16.mxu0 0
        %311 = vmatpush1.bf16.msra.mxu0 0
        %312 = vmatprep.subr.bf16.mxu0 0
        %313 = vmatpush1.bf16.msra.mxu0 0
        %314 = vmatprep.mubr.bf16.mxu0 0
        %315 = vmatmul.mubr.bf16.gmra.mrb[0].mxu0 %v276
        %v316 = vpop.f32.mrb[0].mxu0
        %v317 = vadd.f32 %v272, %v316
        %v318 = vpop.f32.mrb[0].mxu0
        %v319 = vpop.f32.mrb[0].mxu0
        %v320 = vpop.f32.mrb[0].mxu0
        %321 = vdwg.mxu0
        %v322 = vld [vmem:[%s259] sm:$0xf]
        %v323 = vunpack.c.l.bf16 %v322
        %v324 = vld [vmem:[%s2] sm:$0xff]
        %326 = vset.pattern.permute.xlu0 0
        %327 = vperm.xlu0 %326, %v324
        %v328 = vpop.permute.xlu0 %327
        %v330 = vmul.f32 %v323, %v328
        %v331 = vld [vmem:[%s3] sm:$0xff]
        %333 = vset.pattern.permute.xlu0 0
        %334 = vperm.xlu0 %333, %v331
        %v335 = vpop.permute.xlu0 %334
        %v337 = vadd.f32 %v330, %v335
        %v338 = vadd.f32 %v337, %v317
        %v339 = vmax.f32 %v338, 0.0
        %vm340 = vcmask 130048
        %341 = vst.msk [vmem:[%s255] sm:$0xff] %vm340, %v339
        %s342 = sand.u32 %s164, 1
        %s343 = scalar_lea.sflag [#allocation3], %s342
        %s344 = sand.u32 %s164, 1
        %s345 = smul.addr %s344, 8
        %s346 = scalar_lea.vmem [#allocation2], %s345
        // Predicated region
        $region45: #{residual_block.5} parent=43 // pred_check
          %p347 = pneg %p174
        $region46: #{residual_block.5} parent=43 // pred_check_branch
          %349 = sbr.rel (%p347) target = $region48
        $region47: #{residual_block.5} parent=43 // pred_region
          %s351 = ssub.s32 128, 128
          %352 = vsyncadd %s343, %s351
          %s353 = smul.addr %s20, 128
          %s354 = scalar_lea.hbm %s6, %s353
          %s356 = sshll.u32 %s346, 4
          %s357 = int_to_ptr.vmem [resolvable:$true] %s356
          %359 = dma.vmem_to_hbm [thread:$0]  %s357, 128, %s354, %s343
        $region48: #{residual_block.5} parent=43 // pred_fallthru
          _
      $region44: #{residual_block.5} parent=5 // pred_fallthru
        _
      %p360 = scmp.le.s32.totalorder 2, %s15
      // Predicated region
      $region49: #{residual_block.5} parent=5 // pred_check
        %p361 = pneg %p360
      $region50: #{residual_block.5} parent=5 // pred_check_branch
        %363 = sbr.rel (%p361) target = $region52
      $region51: #{residual_block.5} parent=5 // pred_region
        %s364 = ssub.s32 %s15, 2
        // Predicated region
        $region53: #{residual_block.5} parent=51 // pred_check
          %p365 = pneg %p180
        $region54: #{residual_block.5} parent=51 // pred_check_branch
          %367 = sbr.rel (%p365) target = $region56
        $region55: #{residual_block.5} parent=51 // pred_region
          %s368 = sand.u32 %s165, 1
          %s369 = scalar_lea.sflag [#allocation3], %s368
          %s370 = sand.u32 %s165, 1
          %s371 = smul.addr %s370, 8
          %s372 = scalar_lea.vmem [#allocation2], %s371
          %373 = dma.done %s369, 128
        $region56: #{residual_block.5} parent=51 // pred_fallthru
          _
      $region52: #{residual_block.5} parent=5 // pred_fallthru
        _
    $region6: #{residual_block.5} parent=1 // loop_footer
      %s19 = sadd.s32 1, %s15
    $region7: #{residual_block.5} parent=1 // loop_footer_branch
      %14 = sbr.rel target = $region3
    $region8: #{residual_block.5} parent=1 // loop_exit
      _
    %374 = vsyncpa [#allocation3], 1
    %s375 = scalar_lea.sflag [#allocation3], 1
    %376 = vsyncpa %s375, 1

// kernel: residual_block.4
$region0: #{residual_block.4}
  #allocation0 [shape = 'u32[]', space=smem, size = 0x4, offset = 0x4, fixed_abs, tag = 'smem constant byte address 0x4 - core index']
  #allocation1 [shape = 'u32[144,128]{1,0:T(1,128)}', space=vmem, size = 0x12000, scoped, tag = 'internal scratch']
  %s0 = inlined_call_operand.vmem [shape: bf16[2,8,16], index: 0, kind: input, shape index: {}]
  %s1 = inlined_call_operand.vmem [shape: f32[8,1], index: 1, kind: input, shape index: {}]
  %s2 = inlined_call_operand.vmem [shape: f32[8,1], index: 2, kind: input, shape index: {}]
  %s3 = inlined_call_operand.vmem [shape: bf16[8,24], index: 3, kind: input, shape index: {}]
  %s4 = inlined_call_operand.vmem [shape: bf16[2,8,16], index: 4, kind: output, shape index: {0}]
  %s5 = inlined_call_operand.vmem [shape: f32[2,8,2], index: 5, kind: output, shape index: {1}]
  %6 = xla_tuple %s4, %s5
  %s7 = sld [smem:[#allocation0]]
  $region57: #{residual_block.4} parent=0
    _
  %s9 = ssub.s32 1, %s7
  %s10 = scalar_select 0, %s9, %s7
  loop: start=0, step=1, limit=4
  $region2: #{residual_block.4} parent=0 // loop_pre_header
    _
  $region3: #{residual_block.4} parent=0 // loop_header
    %s12 = sphi 0, %s16
    %p13 = scmp.ge.s32.totalorder %s12, 4
    %s22 = sphi 0, %s24
    %s25 = sphi 0, %s22
    %s26 = sphi 0, %s25
    %s42 = sphi 0, %s26
    %s46 = sphi 0, %s46
    %s48 = sphi 0, %s46
    %s49 = sphi 0, %s48
    %s63 = sphi 0, %s49
    %s67 = sphi 0, %s67
    %s69 = sphi 0, %s67
    %s70 = sphi 0, %s69
    %s84 = sphi 0, %s70
    %s88 = sphi 0, %s88
    %s90 = sphi 0, %s88
    %s91 = sphi 0, %s90
    %s105 = sphi 0, %s91
    %s111 = sphi 0, %s113
    %s114 = sphi 0, %s111
    %s115 = sphi 0, %s114
    %s131 = sphi 0, %s115
    %s137 = sphi 0, %s139
    %s140 = sphi 0, %s137
    %s141 = sphi 0, %s140
    %s157 = sphi 0, %s141
  $region4: #{residual_block.4} parent=0 // loop_header_branch
    %15 = sbr.rel (%p13) target = $region8
  $region5: #{residual_block.4} parent=0 // loop_body
    %s17 = ssub.s32 %s12, 1
    %s18 = ssub.s32 %s12, 2
    %s19 = sadd.s32 %s12, 1
    %s20 = ssub.s32 %s12, %s19
    %p21 = scmp.eq.s32.totalorder %s20, 0
    %s23 = sadd.s32 %s22, 1
    %s24 = scalar_select %p21, %s22, %s23
    %p27 = pneg %p21
    %p28 = scmp.eq.s32.totalorder %s12, 1
    %p29 = por %p27, %p28
    %p30 = scmp.ne.s32.totalorder %s22, %s25
    %p31 = scmp.eq.s32.totalorder %s12, 0
    %p32 = por %p30, %p31
    %p33 = scmp.ne.s32.totalorder %s22, %s25
    %p34 = scmp.eq.s32.totalorder %s17, 1
    %p35 = por %p33, %p34
    %p36 = scmp.ne.s32.totalorder %s25, %s26
    %p37 = scmp.eq.s32.totalorder %s17, 0
    %p38 = por %p36, %p37
    %p39 = scmp.ne.s32.totalorder %s25, %s26
    %p40 = scmp.eq.s32.totalorder %s18, 1
    %p41 = por %p39, %p40
    %p43 = scmp.ne.s32.totalorder %s26, %s42
    %p44 = scmp.eq.s32.totalorder %s18, 0
    %p45 = por %p43, %p44
    %s47 = sadd.s32 %s46, 1
    %p50 = scmp.eq.s32.totalorder %s12, 1
    %p51 = scmp.ne.s32.totalorder %s46, %s48
    %p52 = scmp.eq.s32.totalorder %s12, 0
    %p53 = por %p51, %p52
    %p54 = scmp.ne.s32.totalorder %s46, %s48
    %p55 = scmp.eq.s32.totalorder %s17, 1
    %p56 = por %p54, %p55
    %p57 = scmp.ne.s32.totalorder %s48, %s49
    %p58 = scmp.eq.s32.totalorder %s17, 0
    %p59 = por %p57, %p58
    %p60 = scmp.ne.s32.totalorder %s48, %s49
    %p61 = scmp.eq.s32.totalorder %s18, 1
    %p62 = por %p60, %p61
    %p64 = scmp.ne.s32.totalorder %s49, %s63
    %p65 = scmp.eq.s32.totalorder %s18, 0
    %p66 = por %p64, %p65
    %s68 = sadd.s32 %s67, 1
    %p71 = scmp.eq.s32.totalorder %s12, 1
    %p72 = scmp.ne.s32.totalorder %s67, %s69
    %p73 = scmp.eq.s32.totalorder %s12, 0
    %p74 = por %p72, %p73
    %p75 = scmp.ne.s32.totalorder %s67, %s69
    %p76 = scmp.eq.s32.totalorder %s17, 1
    %p77 = por %p75, %p76
    %p78 = scmp.ne.s32.totalorder %s69, %s70
    %p79 = scmp.eq.s32.totalorder %s17, 0
    %p80 = por %p78, %p79
    %p81 = scmp.ne.s32.totalorder %s69, %s70
    %p82 = scmp.eq.s32.totalorder %s18, 1
    %p83 = por %p81, %p82
    %p85 = scmp.ne.s32.totalorder %s70, %s84
    %p86 = scmp.eq.s32.totalorder %s18, 0
    %p87 = por %p85, %p86
    %s89 = sadd.s32 %s88, 1
    %p92 = scmp.eq.s32.totalorder %s12, 1
    %p93 = scmp.ne.s32.totalorder %s88, %s90
    %p94 = scmp.eq.s32.totalorder %s12, 0
    %p95 = por %p93, %p94
    %p96 = scmp.ne.s32.totalorder %s88, %s90
    %p97 = scmp.eq.s32.totalorder %s17, 1
    %p98 = por %p96, %p97
    %p99 = scmp.ne.s32.totalorder %s90, %s91
    %p100 = scmp.eq.s32.totalorder %s17, 0
    %p101 = por %p99, %p100
    %p102 = scmp.ne.s32.totalorder %s90, %s91
    %p103 = scmp.eq.s32.totalorder %s18, 1
    %p104 = por %p102, %p103
    %p106 = scmp.ne.s32.totalorder %s91, %s105
    %p107 = scmp.eq.s32.totalorder %s18, 0
    %p108 = por %p106, %p107
    %s109 = ssub.s32 %s12, %s19
    %p110 = scmp.eq.s32.totalorder %s109, 0
    %s112 = sadd.s32 %s111, 1
    %s113 = scalar_select %p110, %s111, %s112
    %p116 = pneg %p110
    %p117 = scmp.eq.s32.totalorder %s12, 1
    %p118 = por %p116, %p117
    %p119 = scmp.ne.s32.totalorder %s111, %s114
    %p120 = scmp.eq.s32.totalorder %s12, 0
    %p121 = por %p119, %p120
    %p122 = scmp.ne.s32.totalorder %s111, %s114
    %p123 = scmp.eq.s32.totalorder %s17, 1
    %p124 = por %p122, %p123
    %p125 = scmp.ne.s32.totalorder %s114, %s115
    %p126 = scmp.eq.s32.totalorder %s17, 0
    %p127 = por %p125, %p126
    %p128 = scmp.ne.s32.totalorder %s114, %s115
    %p129 = scmp.eq.s32.totalorder %s18, 1
    %p130 = por %p128, %p129
    %p132 = scmp.ne.s32.totalorder %s115, %s131
    %p133 = scmp.eq.s32.totalorder %s18, 0
    %p134 = por %p132, %p133
    %s135 = ssub.s32 %s12, %s19
    %p136 = scmp.eq.s32.totalorder %s135, 0
    %s138 = sadd.s32 %s137, 1
    %s139 = scalar_select %p136, %s137, %s138
    %p142 = pneg %p136
    %p143 = scmp.eq.s32.totalorder %s12, 1
    %p144 = por %p142, %p143
    %p145 = scmp.ne.s32.totalorder %s137, %s140
    %p146 = scmp.eq.s32.totalorder %s12, 0
    %p147 = por %p145, %p146
    %p148 = scmp.ne.s32.totalorder %s137, %s140
    %p149 = scmp.eq.s32.totalorder %s17, 1
    %p150 = por %p148, %p149
    %p151 = scmp.ne.s32.totalorder %s140, %s141
    %p152 = scmp.eq.s32.totalorder %s17, 0
    %p153 = por %p151, %p152
    %p154 = scmp.ne.s32.totalorder %s140, %s141
    %p155 = scmp.eq.s32.totalorder %s18, 1
    %p156 = por %p154, %p155
    %p158 = scmp.ne.s32.totalorder %s141, %s157
    %p159 = scmp.eq.s32.totalorder %s18, 0
    %p160 = por %p158, %p159
    %p161 = scmp.le.s32.totalorder 1, %s12
    %p162 = scmp.lt.s32.totalorder %s12, 3
    %p163 = pnand %p161, %p162
    %p164 = pneg %p163
    // Predicated region
    $region9: #{residual_block.4} parent=5 // pred_check
      _
    $region10: #{residual_block.4} parent=5 // pred_check_branch
      %166 = sbr.rel (%p163) target = $region12
    $region11: #{residual_block.4} parent=5 // pred_region
      %s167 = ssub.s32 %s12, 1
      // Predicated region
      $region13: #{residual_block.4} parent=11 // pred_check
        %p168 = pneg %p59
      $region14: #{residual_block.4} parent=11 // pred_check_branch
        %170 = sbr.rel (%p168) target = $region16
      $region15: #{residual_block.4} parent=11 // pred_region
        _
      $region16: #{residual_block.4} parent=11 // pred_fallthru
        _
      // Predicated region
      $region17: #{residual_block.4} parent=11 // pred_check
        %p171 = pneg %p80
      $region18: #{residual_block.4} parent=11 // pred_check_branch
        %173 = sbr.rel (%p171) target = $region20
      $region19: #{residual_block.4} parent=11 // pred_region
        _
      $region20: #{residual_block.4} parent=11 // pred_fallthru
        _
      // Predicated region
      $region21: #{residual_block.4} parent=11 // pred_check
        %p174 = pneg %p101
      $region22: #{residual_block.4} parent=11 // pred_check_branch
        %176 = sbr.rel (%p174) target = $region24
      $region23: #{residual_block.4} parent=11 // pred_region
        _
      $region24: #{residual_block.4} parent=11 // pred_fallthru
        _
    $region12: #{residual_block.4} parent=5 // pred_fallthru
      _
    %p177 = scmp.lt.s32.totalorder %s12, 2
    // Predicated region
    $region25: #{residual_block.4} parent=5 // pred_check
      %p178 = pneg %p177
    $region26: #{residual_block.4} parent=5 // pred_check_branch
      %180 = sbr.rel (%p178) target = $region28
    $region27: #{residual_block.4} parent=5 // pred_region
      // Predicated region
      $region29: #{residual_block.4} parent=27 // pred_check
        %p181 = pneg %p32
      $region30: #{residual_block.4} parent=27 // pred_check_branch
        %183 = sbr.rel (%p181) target = $region32
      $region31: #{residual_block.4} parent=27 // pred_region
        %p184 = scmp.lt.s32.totalorder %s12, 1
        %s185 = scalar_select %p184, %s12, 1
        %s186 = smul.addr %s185, 4
        %s187 = scalar_lea.vmem %s0, %s186
      $region32: #{residual_block.4} parent=27 // pred_fallthru
        _
    $region28: #{residual_block.4} parent=5 // pred_fallthru
      _
    %p188 = scmp.le.s32.totalorder 1, %s12
    %p189 = scmp.lt.s32.totalorder %s12, 3
    %p190 = pnand %p188, %p189
    %p191 = pneg %p190
    // Predicated region
    $region33: #{residual_block.4} parent=5 // pred_check
      _
    $region34: #{residual_block.4} parent=5 // pred_check_branch
      %193 = sbr.rel (%p190) target = $region36
    $region35: #{residual_block.4} parent=5 // pred_region
      %s194 = ssub.s32 %s12, 1
      %p195 = scmp.lt.s32.totalorder %s17, 1
      %s196 = scalar_select %p195, %s17, 1
      %s197 = smul.addr %s196, 4
      %s198 = scalar_lea.vmem %s0, %s197
      %p199 = pneg %p38
      %p200 = pneg %p35
      %p201 = pneg %p59
      %p202 = pneg %p56
      %p203 = pneg %p80
      %p204 = pneg %p77
      %p205 = pneg %p101
      %p206 = pneg %p98
      %p207 = pneg %p127
      %p208 = pneg %p124
      %p209 = scmp.lt.s32.totalorder %s17, 1
      %s210 = scalar_select %p209, %s17, 1
      %s211 = smul.addr %s210, 4
      %s212 = scalar_lea.vmem %s4, %s211
      %p213 = pneg %p153
      %p214 = pneg %p150
      %p215 = scmp.lt.s32.totalorder %s17, 1
      %s216 = scalar_select %p215, %s17, 1
      %s217 = smul.addr %s216, 8
      %s218 = scalar_lea.vmem %s5, %s217
      %p219 = scmp.lt.s32.totalorder %s17, 1
      %s220 = scalar_select %p219, %s17, 1
      %s221 = smul.addr %s220, 4
      %s222 = scalar_lea.vmem %s0, %s221
      %p223 = scmp.lt.s32.totalorder %s17, 1
      %s224 = scalar_select %p223, %s17, 1
      %s225 = smul.addr %s224, 4
      %s226 = scalar_lea.vmem %s4, %s225
      %p227 = scmp.lt.s32.totalorder %s17, 1
      %s228 = scalar_select %p227, %s17, 1
      %s229 = smul.addr %s228, 8
      %s230 = scalar_lea.vmem %s5, %s229
      %v232 = vld [vmem:[%s222] sm:$0xf]
      %v233 = vunpack.c.l.bf16 %v232
      %v234 = vld [vmem:[%s1] sm:$0xff]
      %236 = vset.pattern.permute.xlu0 0
      %237 = vperm.xlu0 %236, %v234
      %v238 = vpop.permute.xlu0 %237
      %v240 = vmul.f32 %v233, %v238
      %v241 = vld [vmem:[%s2] sm:$0xff]
      %243 = vset.pattern.permute.xlu0 0
      %244 = vperm.xlu0 %243, %v241
      %v245 = vpop.permute.xlu0 %244
      %v247 = vadd.f32 %v240, %v245
      %v248 = vmax.f32 %v247, 0.0
      %v249 = vpack.c.bf16 %v248, %v248
      %251 = vrot.lane.b32.xlu0 %v249, 1
      %v252 = vpop.permute.xlu0 %251
      %vm253 = vcmask 7168
      %v256 = vsel %vm253, 0, %v252
      %257 = vrot.lane.b32.xlu0 %v249, 127
      %v258 = vpop.permute.xlu0 %257
      %vm259 = vcmask 121856
      %v261 = vsel %vm259, %v258, 0
      %v262 = vrot.slane %v249, 4
      %vm263 = vcmask 1043456
      %v265 = vsel %vm263, %v256, %v262
      %v267 = vld [vmem:[%s3] sm:$0xf]
      %vm268 = vcmask 195584
      %v270 = vsel %vm268, %v267, 0
      %v272 = vsel %vm263, %v261, 0
      %274 = vmatprep.subr.bf16.mxu0 0
      %275 = vmatpush1.bf16.msra.mxu0 %v265
      %276 = vmatprep.subr.bf16.mxu0 0
      %277 = vmatpush1.bf16.msra.mxu0 %v272
      %278 = vmatprep.subr.bf16.mxu0 0
      %279 = vmatpush1.bf16.msra.mxu0 0
      %280 = vmatprep.subr.bf16.mxu0 0
      %281 = vmatpush1.bf16.msra.mxu0 0
      %282 = vmatprep.subr.bf16.mxu0 0
      %283 = vmatpush1.bf16.msra.mxu0 0
      %284 = vmatprep.subr.bf16.mxu0 0
      %285 = vmatpush1.bf16.msra.mxu0 0
      %286 = vmatprep.subr.bf16.mxu0 0
      %287 = vmatpush1.bf16.msra.mxu0 0
      %288 = vmatprep.subr.bf16.mxu0 0
      %289 = vmatpush1.bf16.msra.mxu0 0
      %290 = vmatprep.subr.bf16.mxu0 0
      %291 = vmatpush1.bf16.msra.mxu0 0
      %292 = vmatprep.subr.bf16.mxu0 0
      %293 = vmatpush1.bf16.msra.mxu0 0
      %294 = vmatprep.subr.bf16.mxu0 0
      %295 = vmatpush1.bf16.msra.mxu0 0
      %296 = vmatprep.subr.bf16.mxu0 0
      %297 = vmatpush1.bf16.msra.mxu0 0
      %298 = vmatprep.subr.bf16.mxu0 0
      %299 = vmatpush1.bf16.msra.mxu0 0
      %300 = vmatprep.subr.bf16.mxu0 0
      %301 = vmatpush1.bf16.msra.mxu0 0
      %302 = vmatprep.subr.bf16.mxu0 0
      %303 = vmatpush1.bf16.msra.mxu0 0
      %304 = vmatprep.subr.bf16.mxu0 0
      %305 = vmatpush1.bf16.msra.mxu0 0
      %306 = vmatprep.mubr.bf16.mxu0 0
      %307 = vmatmul.mubr.bf16.gmra.mrb[0].mxu0 %v270
      %v308 = vpop.f32.mrb[0].mxu0
      %v309 = vadd.f32 0.0, %v308
      %v310 = vpop.f32.mrb[0].mxu0
      %v311 = vpop.f32.mrb[0].mxu0
      %v312 = vpop.f32.mrb[0].mxu0
      %313 = vdwg.mxu0
      %vm314 = vcmask 130048
      %v315 = vsel %vm314, %v309, 0.0
      %316 = vadd.xlane.f32.xlu0 %v315
      %v317 = vpop.xlane.xlu0 %316
      %v318 = vmul.f32 %v309, %v309
      %v319 = vsel %vm314, %v318, 0.0
      %320 = vadd.xlane.f32.xlu0 %v319
      %v321 = vpop.xlane.xlu0 %320
      %v322 = vsel %vm253, %v317, %v321
      %v323 = vadd.f32 %v322, 0.0
      %v324 = vpack.c.bf16 %v309, %v309
      %vm325 = vcmask 125952
      %326 = vst.msk [vmem:[%s226] sm:$0xf] %vm325, %v324
      %vm327 = vcmask 15360
      %328 = vst.msk [vmem:[%s230] sm:$0xff] %vm327, %v323
      %p329 = scmp.lt.s32.totalorder %s17, 1
      %s330 = scalar_select %p329, %s17, 1
      %s331 = smul.addr %s330, 4
      %s332 = scalar_lea.vmem %s4, %s331
      %p333 = scmp.lt.s32.totalorder %s17, 1
      %s334 = scalar_select %p333, %s17, 1
      %s335 = smul.addr %s334, 8
      %s336 = scalar_lea.vmem %s5, %s335
      // Predicated region
      $region37: #{residual_block.4} parent=35 // pred_check
        %p337 = pneg %p124
      $region38: #{residual_block.4} parent=35 // pred_check_branch
        %339 = sbr.rel (%p337) target = $region40
      $region39: #{residual_block.4} parent=35 // pred_region
        _
      $region40: #{residual_block.4} parent=35 // pred_fallthru
        _
      // Predicated region
      $region41: #{residual_block.4} parent=35 // pred_check
        %p340 = pneg %p150
      $region42: #{residual_block.4} parent=35 // pred_check_branch
        %342 = sbr.rel (%p340) target = $region44
      $region43: #{residual_block.4} parent=35 // pred_region
        _
      $region44: #{residual_block.4} parent=35 // pred_fallthru
        _
    $region36: #{residual_block.4} parent=5 // pred_fallthru
      _
    %p343 = scmp.le.s32.totalorder 2, %s12
    // Predicated region
    $region45: #{residual_block.4} parent=5 // pred_check
      %p344 = pneg %p343
    $region46: #{residual_block.4} parent=5 // pred_check_branch
      %346 = sbr.rel (%p344) target = $region48
    $region47: #{residual_block.4} parent=5 // pred_region
      %s347 = ssub.s32 %s12, 2
      // Predicated region
      $region49: #{residual_block.4} parent=47 // pred_check
        %p348 = pneg %p130
      $region50: #{residual_block.4} parent=47 // pred_check_branch
        %350 = sbr.rel (%p348) target = $region52
      $region51: #{residual_block.4} parent=47 // pred_region
        %p351 = scmp.lt.s32.totalorder %s18, 1
        %s352 = scalar_select %p351, %s18, 1
        %s353 = smul.addr %s352, 4
        %s354 = scalar_lea.vmem %s4, %s353
      $region52: #{residual_block.4} parent=47 // pred_fallthru
        _
      // Predicated region
      $region53: #{residual_block.4} parent=47 // pred_check
        %p355 = pneg %p156
      $region54: #{residual_block.4} parent=47 // pred_check_branch
        %357 = sbr.rel (%p355) target = $region56
      $region55: #{residual_block.4} parent=47 // pred_region
        %p358 = scmp.lt.s32.totalorder %s18, 1
        %s359 = scalar_select %p358, %s18, 1
        %s360 = smul.addr %s359, 8
        %s361 = scalar_lea.vmem %s5, %s360
      $region56: #{residual_block.4} parent=47 // pred_fallthru
        _
    $region48: #{residual_block.4} parent=5 // pred_fallthru
      _
  $region6: #{residual_block.4} parent=0 // loop_footer
    %s16 = sadd.s32 1, %s12
  $region7: #{residual_block.4} parent=0 // loop_footer_branch
    %11 = sbr.rel target = $region3
  $region8: #{residual_block.4} parent=0 // loop_exit
    _

</llo_original>
